<compile_context>
chip_gen: v6e
topology: v6e:2x2x1
jax: 0.10.0
libtpu: 0.0.40
codegen_flags: <defaults>
</compile_context>

<pallas_src>
import numpy as np
import jax
import jax.numpy as jnp
from jax.experimental import pallas as pl
from jax.experimental.pallas import tpu as pltpu


def _round_up(n, m):
    return ((n + m - 1) // m) * m


def _slab_offsets(L):
    """Row offsets of each weight block inside the packed slab (all 8-aligned)."""
    TL, L2 = 2 * L, L // 2
    ru8 = lambda n: _round_up(n, 8)
    oA0 = 0
    oA1 = oA0 + ru8(TL)
    oW1 = oA1 + ru8(TL)
    oW2 = oW1 + ru8(L)
    oBB = oW2 + ru8(L2)
    rows = oBB + ru8(TL)
    return oA0, oA1, oW1, oW2, oBB, rows


# --------------------------------------------------------------------------
# Kernel: activations are (features, batch) = (2L, Bt); batch on lanes.
# --------------------------------------------------------------------------
def combine_cov_net_kernel(samp_ref, x_ref, slab_ref, out_ref, cat_ref):
    L, Bt = x_ref.shape
    TL = 2 * L
    L2 = L // 2
    oA0, oA1, oW1, oW2, oBB, _ = _slab_offsets(L)
    f32 = jnp.float32

    def leaky(v):                       # nn.LeakyReLU, negative_slope = 0.01
        return jnp.where(v >= 0, v, 0.01 * v)

    def mm(w, a):                       # weights on the LHS, batch on lanes
        return jnp.dot(w, a, preferred_element_type=f32)

    # Static, 8-aligned slices into the grid-invariant weight slab.
    A0 = slab_ref[oA0:oA0 + TL, :]            # (2L, 2L) conv block 0 (transposed)
    A1 = slab_ref[oA1:oA1 + TL, :]            # (2L, 2L) conv block 1 (transposed)
    W1 = slab_ref[oW1:oW1 + L, :]             # (L,  2L) MLP layer 1 (torch (out,in))
    W2 = slab_ref[oW2:oW2 + L2, 0:L]          # (L/2, L) MLP layer 2
    BB = slab_ref[oBB:oBB + TL, :]            # bias / w3 columns
    bcol0 = BB[:, 0:1]                        # (2L, 1) conv biases, layer 0
    bcol1 = BB[:, 1:2]                        # (2L, 1) conv biases, layer 1
    b1col = BB[0:L, 2:3]                      # (L,  1)
    b2col = BB[0:L2, 3:4]                     # (L/2,1)
    b3 = BB[0:1, 4:5]                         # (1,  1)
    w3col = BB[0:L2, 5:6]                     # (L/2,1) final Linear weights

    # concate = [ sample expanded over L | x ], laid out feature-major (2L, Bt).
    cat_ref[0:L, :] = jnp.broadcast_to(samp_ref[...], (L, Bt))
    cat_ref[L:TL, :] = x_ref[...]
    cat = cat_ref[...]

    # Two CombineCov blocks; both Conv1d(2->1, k=3, pad=1) fused into one matmul:
    #   cat <- cat + LeakyReLU(A_l @ cat + bias_col_l)
    cat = cat + leaky(mm(A0, cat) + bcol0)
    cat = cat + leaky(mm(A1, cat) + bcol1)

    # MLP: Linear -> LeakyReLU -> Linear -> LeakyReLU -> Linear -> Sigmoid.
    h1 = leaky(mm(W1, cat) + b1col)                        # (L,   Bt)
    h2 = leaky(mm(W2, h1) + b2col)                         # (L/2, Bt)
    h3 = jnp.sum(w3col * h2, axis=0, keepdims=True) + b3   # (1,   Bt)  VPU + XLU
    out_ref[...] = 1.0 / (1.0 + jnp.exp(-h3))              # sigmoid (EUP exp)


# --------------------------------------------------------------------------
# Wrapper-side parameter folding (pure functions of the params, built once)
# --------------------------------------------------------------------------
def _pack_weight_slab(params, L):
    f32 = jnp.float32
    TL, L2 = 2 * L, L // 2
    oA0, oA1, oW1, oW2, oBB, rows = _slab_offsets(L)

    cw = jnp.asarray(params["conv_w"], f32)   # (layer, out_conv, in_ch, tap)
    cb = jnp.asarray(params["conv_b"], f32)   # (layer, out_conv)
    w1 = jnp.asarray(params["w1"], f32)       # (L, 2L)
    b1 = jnp.asarray(params["b1"], f32)       # (L,)
    w2 = jnp.asarray(params["w2"], f32)       # (L/2, L)
    b2 = jnp.asarray(params["b2"], f32)       # (L/2,)
    w3 = jnp.asarray(params["w3"], f32)       # (1, L/2)
    b3 = jnp.asarray(params["b3"], f32)       # (1,)

    def tapmat(taps):
        # (a @ M)[t] = taps[0]*a[t-1] + taps[1]*a[t] + taps[2]*a[t+1]  (zero pad)
        return (taps[0] * jnp.eye(L, k=1, dtype=f32)
                + taps[1] * jnp.eye(L, dtype=f32)
                + taps[2] * jnp.eye(L, k=-1, dtype=f32))

    def conv_block_T(cw_l):                   # cw_l: (out_conv, in_ch, tap)
        a = jnp.concatenate([
            jnp.concatenate([tapmat(cw_l[0, 0]), tapmat(cw_l[1, 0])], axis=1),
            jnp.concatenate([tapmat(cw_l[0, 1]), tapmat(cw_l[1, 1])], axis=1)],
            axis=0)                           # cat_new = cat @ a   (batch-major)
        return a.T                            # transposed for W @ act layout

    bb = jnp.zeros((TL, TL), f32)
    bb = bb.at[0:L, 0].set(cb[0, 0]).at[L:TL, 0].set(cb[0, 1])
    bb = bb.at[0:L, 1].set(cb[1, 0]).at[L:TL, 1].set(cb[1, 1])
    bb = bb.at[0:L, 2].set(b1)
    bb = bb.at[0:L2, 3].set(b2)
    bb = bb.at[0, 4].set(b3[0])
    bb = bb.at[0:L2, 5].set(w3[0])

    slab = jnp.zeros((rows, TL), f32)
    slab = slab.at[oA0:oA0 + TL, :].set(conv_block_T(cw[0]))
    slab = slab.at[oA1:oA1 + TL, :].set(conv_block_T(cw[1]))
    slab = slab.at[oW1:oW1 + L, :].set(w1)
    slab = slab.at[oW2:oW2 + L2, 0:L].set(w2)
    slab = slab.at[oBB:oBB + TL, :].set(bb)
    return slab


def _choose_batch_tile(B, block_b):
    lane = 256                                   # full MXU width on v6e/v7x (2x128 on v5e)
    want = max(int(block_b) // lane, 1) * lane   # requested lane tile, multiple of 256
    Bt = min(want, _round_up(max(B, 1), lane))   # never larger than the padded batch
    Bp = _round_up(max(B, 1), Bt)
    # v7x has 2 TensorCores: keep >= 2 parallel grid steps when the batch allows.
    if Bp // Bt < 2 and Bp >= 2 * lane:
        Bt = _round_up(Bp // 2, lane)
        Bp = _round_up(B, Bt)
    return Bt, Bp


def combine_cov_net_forward(sample, x, params, *, block_b=1024):
    """sample: (B, 1, 1), x: (B, 1, L). Returns (B, 1, 1) == CombineCov_Net.forward."""
    B, _, L = x.shape
    if L % 8 != 0 or L < 16:
        raise ValueError("nc_band (last dim of x) must be a multiple of 8 and >= 16")
    Bt, Bp = _choose_batch_tile(B, block_b)
    TL, L2 = 2 * L, L // 2

    # Batch goes on the lane axis: x as (L, Bp), sample as (1, Bp).
    x_t = jnp.asarray(x, jnp.float32).reshape(B, L).T
    s_t = jnp.asarray(sample, jnp.float32).reshape(B, 1).T
    if Bp != B:
        pad = Bp - B
        x_t = jnp.concatenate([x_t, jnp.zeros((L, pad), jnp.float32)], axis=1)
        s_t = jnp.concatenate([s_t, jnp.zeros((1, pad), jnp.float32)], axis=1)

    slab = _pack_weight_slab(params, L)
    cost = pl.CostEstimate(
        flops=int(Bp) * (4 * TL * TL + 2 * L * TL + 2 * L2 * L + 2 * L2 + 12 * TL),
        transcendentals=int(Bp),
        bytes_accessed=int(4 * (x_t.size + s_t.size + slab.size + Bp)),
    )

    out = pl.pallas_call(
        combine_cov_net_kernel,
        grid=(Bp // Bt,),
        out_shape=jax.ShapeDtypeStruct((1, Bp), jnp.float32),
        in_specs=[
            pl.BlockSpec((1, Bt), lambda i: (0, i)),        # sample, lane-blocked
            pl.BlockSpec((L, Bt), lambda i: (0, i)),        # x, lane-blocked
            pl.BlockSpec(slab.shape, lambda i: (0, 0)),     # weights, grid-invariant
        ],
        out_specs=pl.BlockSpec((1, Bt), lambda i: (0, i)),  # lane-dense output row
        scratch_shapes=[pltpu.VMEM((TL, Bt), jnp.float32)], # [sample|x] working slab
        compiler_params=pltpu.CompilerParams(
            dimension_semantics=("parallel",)),
        cost_estimate=cost,
    )(s_t, x_t, slab)
    return out[0, :B].reshape(B, 1, 1)


# --------------------------------------------------------------------------
# Pure-JAX reference mirroring the PyTorch module exactly
# --------------------------------------------------------------------------
def ref_forward(sample, x, params):
    B, _, L = x.shape
    samp = jnp.broadcast_to(sample, x.shape)
    ch = jnp.concatenate([samp, x], axis=1)                 # (B, 2, L)
    cw, cb = params["conv_w"], params["conv_b"]

    def conv(inp, w, b):
        pad = jnp.pad(inp, ((0, 0), (0, 0), (1, 1)))
        y = b
        for ci in range(2):
            for k in range(3):
                y = y + w[ci, k] * pad[:, ci, k:k + L]
        return y

    def leaky(v):
        return jnp.where(v >= 0, v, 0.01 * v)

    for layer in range(2):
        y0 = leaky(conv(ch, cw[layer, 0], cb[layer, 0]))
        y1 = leaky(conv(ch, cw[layer, 1], cb[layer, 1]))
        ch = ch + jnp.stack([y0, y1], axis=1)

    h = ch.reshape(B, 1, 2 * L)                             # concate.view(B, 1, 2L)
    h = leaky(h @ params["w1"].T + params["b1"])
    h = leaky(h @ params["w2"].T + params["b2"])
    h = h @ params["w3"].T + params["b3"]
    return jax.nn.sigmoid(h)


if __name__ == "__main__":
    n_clip, sub_band = 2, 32
    nc_band = sub_band // n_clip        # = 16 (per-clip band = MLP input half-width)
    B = 256                             # batched over clips/bands/time steps

    key = jax.random.PRNGKey(0)
    ks = jax.random.split(key, 10)
    params = {
        # 2 CombineCov blocks x 2 Conv1d(2->1, k=3) each: weights (2,2,2,3), biases (2,2)
        "conv_w": 0.3 * jax.random.normal(ks[0], (2, 2, 2, 3), jnp.float32),
        "conv_b": 0.1 * jax.random.normal(ks[1], (2, 2), jnp.float32),
        # MLP: Linear(2*nc_band -> nc_band), Linear(nc_band -> nc_band//2), Linear(nc_band//2 -> 1)
        "w1": 0.2 * jax.random.normal(ks[2], (nc_band, 2 * nc_band), jnp.float32),
        "b1": 0.1 * jax.random.normal(ks[3], (nc_band,), jnp.float32),
        "w2": 0.2 * jax.random.normal(ks[4], (nc_band // 2, nc_band), jnp.float32),
        "b2": 0.1 * jax.random.normal(ks[5], (nc_band // 2,), jnp.float32),
        "w3": 0.2 * jax.random.normal(ks[6], (1, nc_band // 2), jnp.float32),
        "b3": 0.1 * jax.random.normal(ks[7], (1,), jnp.float32),
    }
    sample = jax.random.normal(ks[8], (B, 1, 1), jnp.float32)
    x = jax.random.normal(ks[9], (B, 1, nc_band), jnp.float32)

    pred = combine_cov_net_forward(sample, x, params, block_b=1024)
    jax.block_until_ready(pred)
    assert pred.shape == (B, 1, 1)

    ref = ref_forward(sample, x, params)
    np.testing.assert_allclose(np.asarray(pred), np.asarray(ref), rtol=1e-5, atol=2e-5)

    # Module-native tiny batch (exercises the lane-padding path, single tile).
    pred_small = combine_cov_net_forward(sample[:2], x[:2], params)
    jax.block_until_ready(pred_small)
    np.testing.assert_allclose(np.asarray(pred_small), np.asarray(ref[:2]),
                               rtol=1e-5, atol=2e-5)

    print("KERNEL_OK")
</pallas_src>

<mosaic_0001>
module attributes {stable_mosaic.version = 11 : i64} {
  func.func @combine_cov_net_kernel(%arg0: i32, %arg1: memref<1x256xf32, #tpu.memory_space<vmem>>, %arg2: memref<16x256xf32, #tpu.memory_space<vmem>>, %arg3: memref<120x32xf32, #tpu.memory_space<vmem>>, %arg4: memref<1x256xf32, #tpu.memory_space<vmem>>, %arg5: memref<32x256xf32, #tpu.memory_space<vmem>>) attributes {dimension_semantics = [#tpu.dimension_semantics<parallel>], iteration_bounds = array<i64: 1>, scalar_prefetch = 0 : i64, scratch_operands = 1 : i64, tpu.core_type = #tpu.core_type<tc>, window_params = [{transform_indices = @transform_0, window_bounds = array<i64: 1, 256>}, {transform_indices = @transform_1, window_bounds = array<i64: 16, 256>}, {pipeline_mode = #tpu.pipeline_mode<synchronous>, transform_indices = @transform_2, window_bounds = array<i64: 120, 32>}, {transform_indices = @transform_3, window_bounds = array<i64: 1, 256>}]} {
    %c0 = arith.constant 0 : index
    %c0_0 = arith.constant 0 : index
    %0 = vector.load %arg3[%c0, %c0_0] : memref<120x32xf32, #tpu.memory_space<vmem>>, vector<32x32xf32>
    %c32 = arith.constant 32 : index
    %c0_1 = arith.constant 0 : index
    %1 = vector.load %arg3[%c32, %c0_1] : memref<120x32xf32, #tpu.memory_space<vmem>>, vector<32x32xf32>
    %c64 = arith.constant 64 : index
    %c0_2 = arith.constant 0 : index
    %2 = vector.load %arg3[%c64, %c0_2] : memref<120x32xf32, #tpu.memory_space<vmem>>, vector<16x32xf32>
    %c80 = arith.constant 80 : index
    %c0_3 = arith.constant 0 : index
    %3 = vector.load %arg3[%c80, %c0_3] : memref<120x32xf32, #tpu.memory_space<vmem>>, vector<8x16xf32>
    %c88 = arith.constant 88 : index
    %c0_4 = arith.constant 0 : index
    %4 = vector.load %arg3[%c88, %c0_4] : memref<120x32xf32, #tpu.memory_space<vmem>>, vector<32x32xf32>
    %5 = vector.extract_strided_slice %4 {offsets = [0, 0], sizes = [32, 1], strides = [1, 1]} : vector<32x32xf32> to vector<32x1xf32>
    %6 = vector.extract_strided_slice %4 {offsets = [0, 1], sizes = [32, 1], strides = [1, 1]} : vector<32x32xf32> to vector<32x1xf32>
    %7 = vector.extract_strided_slice %4 {offsets = [0, 2], sizes = [16, 1], strides = [1, 1]} : vector<32x32xf32> to vector<16x1xf32>
    %8 = vector.extract_strided_slice %4 {offsets = [0, 3], sizes = [8, 1], strides = [1, 1]} : vector<32x32xf32> to vector<8x1xf32>
    %9 = vector.extract_strided_slice %4 {offsets = [0, 4], sizes = [1, 1], strides = [1, 1]} : vector<32x32xf32> to vector<1x1xf32>
    %10 = vector.extract_strided_slice %4 {offsets = [0, 5], sizes = [8, 1], strides = [1, 1]} : vector<32x32xf32> to vector<8x1xf32>
    %c0_5 = arith.constant 0 : index
    %c0_6 = arith.constant 0 : index
    %11 = vector.load %arg1[%c0_5, %c0_6] : memref<1x256xf32, #tpu.memory_space<vmem>>, vector<1x256xf32>
    %12 = vector.shape_cast %11 : vector<1x256xf32> to vector<1x256xf32>
    %13 = vector.broadcast %12 : vector<1x256xf32> to vector<16x256xf32>
    %c0_7 = arith.constant 0 : index
    %c0_8 = arith.constant 0 : index
    %14 = vector.load %arg5[%c0_7, %c0_8] : memref<32x256xf32, #tpu.memory_space<vmem>>, vector<16x256xf32>
    tpu.vector_store %arg5[%c0_7, %c0_8], %13 {strides = array<i32>} : memref<32x256xf32, #tpu.memory_space<vmem>>, vector<16x256xf32>,
    %c0_9 = arith.constant 0 : index
    %c0_10 = arith.constant 0 : index
    %15 = vector.load %arg2[%c0_9, %c0_10] : memref<16x256xf32, #tpu.memory_space<vmem>>, vector<16x256xf32>
    %c16 = arith.constant 16 : index
    %c0_11 = arith.constant 0 : index
    %16 = vector.load %arg5[%c16, %c0_11] : memref<32x256xf32, #tpu.memory_space<vmem>>, vector<16x256xf32>
    tpu.vector_store %arg5[%c16, %c0_11], %15 {strides = array<i32>} : memref<32x256xf32, #tpu.memory_space<vmem>>, vector<16x256xf32>,
    %c0_12 = arith.constant 0 : index
    %c0_13 = arith.constant 0 : index
    %17 = vector.load %arg5[%c0_12, %c0_13] : memref<32x256xf32, #tpu.memory_space<vmem>>, vector<32x256xf32>
    %cst = arith.constant dense<0.000000e+00> : vector<32x256xf32>
    %18 = tpu.matmul %0, %17, %cst {dimension_numbers = #tpu.dot_dimension_numbers<[1], [0], [0], [1], [0, 0, 1, 1], [], []>} : vector<32x32xf32>, vector<32x256xf32>, vector<32x256xf32> -> vector<32x256xf32>
    %19 = vector.broadcast %5 : vector<32x1xf32> to vector<32x256xf32>
    %20 = arith.addf %18, %19 : vector<32x256xf32>
    %cst_14 = arith.constant 0.000000e+00 : f32
    %21 = vector.broadcast %cst_14 : f32 to vector<32x256xf32>
    %22 = arith.cmpf oge, %20, %21 : vector<32x256xf32>
    %cst_15 = arith.constant 0.00999999977 : f32
    %23 = vector.broadcast %cst_15 : f32 to vector<32x256xf32>
    %24 = arith.mulf %23, %20 : vector<32x256xf32>
    %25 = arith.select %22, %20, %24 : vector<32x256xi1>, vector<32x256xf32>
    %26 = arith.addf %17, %25 : vector<32x256xf32>
    %cst_16 = arith.constant dense<0.000000e+00> : vector<32x256xf32>
    %27 = tpu.matmul %1, %26, %cst_16 {dimension_numbers = #tpu.dot_dimension_numbers<[1], [0], [0], [1], [0, 0, 1, 1], [], []>} : vector<32x32xf32>, vector<32x256xf32>, vector<32x256xf32> -> vector<32x256xf32>
    %28 = vector.broadcast %6 : vector<32x1xf32> to vector<32x256xf32>
    %29 = arith.addf %27, %28 : vector<32x256xf32>
    %cst_17 = arith.constant 0.000000e+00 : f32
    %30 = vector.broadcast %cst_17 : f32 to vector<32x256xf32>
    %31 = arith.cmpf oge, %29, %30 : vector<32x256xf32>
    %cst_18 = arith.constant 0.00999999977 : f32
    %32 = vector.broadcast %cst_18 : f32 to vector<32x256xf32>
    %33 = arith.mulf %32, %29 : vector<32x256xf32>
    %34 = arith.select %31, %29, %33 : vector<32x256xi1>, vector<32x256xf32>
    %35 = arith.addf %26, %34 : vector<32x256xf32>
    %cst_19 = arith.constant dense<0.000000e+00> : vector<16x256xf32>
    %36 = tpu.matmul %2, %35, %cst_19 {dimension_numbers = #tpu.dot_dimension_numbers<[1], [0], [0], [1], [0, 0, 1, 1], [], []>} : vector<16x32xf32>, vector<32x256xf32>, vector<16x256xf32> -> vector<16x256xf32>
    %37 = vector.broadcast %7 : vector<16x1xf32> to vector<16x256xf32>
    %38 = arith.addf %36, %37 : vector<16x256xf32>
    %cst_20 = arith.constant 0.000000e+00 : f32
    %39 = vector.broadcast %cst_20 : f32 to vector<16x256xf32>
    %40 = arith.cmpf oge, %38, %39 : vector<16x256xf32>
    %cst_21 = arith.constant 0.00999999977 : f32
    %41 = vector.broadcast %cst_21 : f32 to vector<16x256xf32>
    %42 = arith.mulf %41, %38 : vector<16x256xf32>
    %43 = arith.select %40, %38, %42 : vector<16x256xi1>, vector<16x256xf32>
    %cst_22 = arith.constant dense<0.000000e+00> : vector<8x256xf32>
    %44 = tpu.matmul %3, %43, %cst_22 {dimension_numbers = #tpu.dot_dimension_numbers<[1], [0], [0], [1], [0, 0, 1, 1], [], []>} : vector<8x16xf32>, vector<16x256xf32>, vector<8x256xf32> -> vector<8x256xf32>
    %45 = vector.broadcast %8 : vector<8x1xf32> to vector<8x256xf32>
    %46 = arith.addf %44, %45 : vector<8x256xf32>
    %cst_23 = arith.constant 0.000000e+00 : f32
    %47 = vector.broadcast %cst_23 : f32 to vector<8x256xf32>
    %48 = arith.cmpf oge, %46, %47 : vector<8x256xf32>
    %cst_24 = arith.constant 0.00999999977 : f32
    %49 = vector.broadcast %cst_24 : f32 to vector<8x256xf32>
    %50 = arith.mulf %49, %46 : vector<8x256xf32>
    %51 = arith.select %48, %46, %50 : vector<8x256xi1>, vector<8x256xf32>
    %52 = vector.broadcast %10 : vector<8x1xf32> to vector<8x256xf32>
    %53 = arith.mulf %52, %51 : vector<8x256xf32>
    %cst_25 = arith.constant dense<0.000000e+00> : vector<256xf32>
    %54 = vector.multi_reduction <add>, %53, %cst_25 [0] : vector<8x256xf32> to vector<256xf32>
    %55 = vector.shape_cast %54 : vector<256xf32> to vector<1x256xf32>
    %56 = vector.broadcast %9 : vector<1x1xf32> to vector<1x256xf32>
    %57 = arith.addf %55, %56 : vector<1x256xf32>
    %cst_26 = arith.constant 0.000000e+00 : f32
    %58 = vector.broadcast %cst_26 : f32 to vector<1x256xf32>
    %59 = arith.subf %58, %57 : vector<1x256xf32>
    %60 = math.exp %59 : vector<1x256xf32>
    %cst_27 = arith.constant 1.000000e+00 : f32
    %61 = vector.broadcast %cst_27 : f32 to vector<1x256xf32>
    %62 = arith.addf %61, %60 : vector<1x256xf32>
    %cst_28 = arith.constant 1.000000e+00 : f32
    %63 = vector.broadcast %cst_28 : f32 to vector<1x256xf32>
    %64 = arith.divf %63, %62 : vector<1x256xf32>
    %c0_29 = arith.constant 0 : index
    %c0_30 = arith.constant 0 : index
    %65 = vector.load %arg4[%c0_29, %c0_30] : memref<1x256xf32, #tpu.memory_space<vmem>>, vector<1x256xf32>
    tpu.vector_store %arg4[%c0_29, %c0_30], %64 {strides = array<i32>} : memref<1x256xf32, #tpu.memory_space<vmem>>, vector<1x256xf32>,
    return
  }
  func.func @transform_0(%arg0: i32) -> (i32, i32) {
    %c0_i32 = arith.constant 0 : i32
    %c0_i32_0 = arith.constant 0 : i32
    return %c0_i32, %arg0 : i32, i32
  }
  func.func @transform_1(%arg0: i32) -> (i32, i32) {
    %c0_i32 = arith.constant 0 : i32
    %c0_i32_0 = arith.constant 0 : i32
    return %c0_i32, %arg0 : i32, i32
  }
  func.func @transform_2(%arg0: i32) -> (i32, i32) {
    %c0_i32 = arith.constant 0 : i32
    %c0_i32_0 = arith.constant 0 : i32
    %c0_i32_1 = arith.constant 0 : i32
    return %c0_i32, %c0_i32_0 : i32, i32
  }
  func.func @transform_3(%arg0: i32) -> (i32, i32) {
    %c0_i32 = arith.constant 0 : i32
    %c0_i32_0 = arith.constant 0 : i32
    return %c0_i32, %arg0 : i32, i32
  }
}

</mosaic_0001>

<llo_original>
// kernel: tpu_custom_call.1
$region0: #{tpu_custom_call.1}
  #allocation0 [shape = 'u32[]', space=smem, size = 0x4, offset = 0x4, fixed_abs, tag = 'smem constant byte address 0x4 - core index']
  #allocation1 [shape = 'u32[144,128]{1,0:T(1,128)}', space=vmem, size = 0x12000, scoped, tag = 'internal scratch']
  #allocation2 [shape = 'f32[32,256]{1,0:T(8,128)}', space=vmem, size = 0x8000, scoped, tag = 'scratch operand']
  %s0 = inlined_call_operand.vmem [shape: f32[1,256], index: 0, kind: input, shape index: {}]
  %s1 = inlined_call_operand.vmem [shape: f32[16,256], index: 1, kind: input, shape index: {}]
  %s2 = inlined_call_operand.vmem [shape: f32[120,32], index: 2, kind: input, shape index: {}]
  %s3 = inlined_call_operand.hbm [shape: f32[1,256], index: 3, kind: output, shape index: {}]
  %s4 = sld [smem:[#allocation0]]
  $region22: #{tpu_custom_call.1} parent=0
    _
  %s6 = ssub.s32 1, %s4
  %s7 = scalar_select 0, %s6, %s4
  $region1: #{tpu_custom_call.1} parent=0
    #allocation3 [shape = 'u8[1024]{0}', space=vmem, size = 0x400, scoped, tag = 'output window, operand 0, single buffered']
    #allocation4 [shape = 's32[1]{0}', space=sflag, size = 0x4, scoped, tag = 'scoped memory for tpu_custom_call.1']
    %8 = vsyncpa [#allocation4], 0
    // Predicated region
    $region2: #{tpu_custom_call.1} parent=1 // pred_check
      _
    $region3: #{tpu_custom_call.1} parent=1 // pred_check_branch
      %10 = sbr.rel (0) target = $region5
    $region4: #{tpu_custom_call.1} parent=1 // pred_region
      _
    $region5: #{tpu_custom_call.1} parent=1 // pred_fallthru
      _
    // Predicated region
    $region6: #{tpu_custom_call.1} parent=1 // pred_check
      _
    $region7: #{tpu_custom_call.1} parent=1 // pred_check_branch
      %12 = sbr.rel (0) target = $region9
    $region8: #{tpu_custom_call.1} parent=1 // pred_region
      _
    $region9: #{tpu_custom_call.1} parent=1 // pred_fallthru
      _
    // Predicated region
    $region10: #{tpu_custom_call.1} parent=1 // pred_check
      _
    $region11: #{tpu_custom_call.1} parent=1 // pred_check_branch
      %14 = sbr.rel (0) target = $region13
    $region12: #{tpu_custom_call.1} parent=1 // pred_region
      _
    $region13: #{tpu_custom_call.1} parent=1 // pred_fallthru
      _
    %v15 = vld [vmem:[%s2] sm:$0xff]
    %v16 = vld [vmem:[%s2 + $0x8] sm:$0xff]
    %v17 = vld [vmem:[%s2 + $0x10] sm:$0xff]
    %v18 = vld [vmem:[%s2 + $0x18] sm:$0xff]
    %v19 = vld [vmem:[%s2 + $0x20] sm:$0xff]
    %v20 = vld [vmem:[%s2 + $0x28] sm:$0xff]
    %v21 = vld [vmem:[%s2 + $0x30] sm:$0xff]
    %v22 = vld [vmem:[%s2 + $0x38] sm:$0xff]
    %v23 = vld [vmem:[%s2 + $0x40] sm:$0xff]
    %v24 = vld [vmem:[%s2 + $0x48] sm:$0xff]
    %v25 = vld [vmem:[%s2 + $0x50] sm:$0xff]
    %v26 = vld [vmem:[%s2 + $0x58] sm:$0xff]
    %v27 = vld [vmem:[%s2 + $0x60] sm:$0xff]
    %v28 = vld [vmem:[%s2 + $0x68] sm:$0xff]
    %v29 = vld [vmem:[%s2 + $0x70] sm:$0xff]
    %v30 = vld [vmem:[%s0] sm:$0x3]
    %v32 = vlaneseq
    %v33 = vshrl.u32 %v32, 7
    %v34 = vsub.s32 0, %v33
    %v35 = vrot.slane %v30, %v34
    %v36 = vlaneseq
    %v37 = vshrl.u32 %v36, 7
    %v38 = vsub.s32 1, %v37
    %v39 = vrot.slane %v30, %v38
    %42 = vst [vmem:[#allocation2] sm:$0xff] %v35
    %43 = vst [vmem:[#allocation2 + $0x8] sm:$0xff] %v39
    %44 = vst [vmem:[#allocation2 + $0x10] sm:$0xff] %v35
    %45 = vst [vmem:[#allocation2 + $0x18] sm:$0xff] %v39
    %v46 = vld [vmem:[%s1] sm:$0xff]
    %v47 = vld [vmem:[%s1 + $0x8] sm:$0xff]
    %v48 = vld [vmem:[%s1 + $0x10] sm:$0xff]
    %v49 = vld [vmem:[%s1 + $0x18] sm:$0xff]
    %50 = vst [vmem:[#allocation2 + $0x20] sm:$0xff] %v46
    %51 = vst [vmem:[#allocation2 + $0x28] sm:$0xff] %v47
    %52 = vst [vmem:[#allocation2 + $0x30] sm:$0xff] %v48
    %53 = vst [vmem:[#allocation2 + $0x38] sm:$0xff] %v49
    %v54 = vld [vmem:[#allocation2] sm:$0xff]
    %v55 = vld [vmem:[#allocation2 + $0x8] sm:$0xff]
    %v56 = vld [vmem:[#allocation2 + $0x10] sm:$0xff]
    %v57 = vld [vmem:[#allocation2 + $0x18] sm:$0xff]
    %v58 = vld [vmem:[#allocation2 + $0x20] sm:$0xff]
    %v59 = vld [vmem:[#allocation2 + $0x28] sm:$0xff]
    %v60 = vld [vmem:[#allocation2 + $0x30] sm:$0xff]
    %v61 = vld [vmem:[#allocation2 + $0x38] sm:$0xff]
    %63 = vset.pattern.permute.xlu0 0
    %64 = vperm.xlu0 %63, %v26
    %v65 = vpop.permute.xlu0 %64
    %68 = vset.pattern.permute.xlu0 0
    %69 = vperm.xlu0 %68, %v27
    %v70 = vpop.permute.xlu0 %69
    %73 = vset.pattern.permute.xlu0 0
    %74 = vperm.xlu0 %73, %v28
    %v75 = vpop.permute.xlu0 %74
    %78 = vset.pattern.permute.xlu0 0
    %79 = vperm.xlu0 %78, %v29
    %v80 = vpop.permute.xlu0 %79
    %vm82 = vcmask 261120
    %v84 = vsel %vm82, %v15, 0
    %v87 = vsel %vm82, %v16, 0
    %v90 = vsel %vm82, %v17, 0
    %v93 = vsel %vm82, %v18, 0
    %95 = vmatprep.subr.mxu0 0.0
    %96 = vmatpush1.msra.mxu0 0.0
    %97 = vmatprep.subr.mxu0 0.0
    %98 = vmatpush1.msra.mxu0 0.0
    %99 = vmatprep.subr.mxu0 0.0
    %100 = vmatpush1.msra.mxu0 0.0
    %101 = vmatprep.subr.mxu0 0.0
    %102 = vmatpush1.msra.mxu0 0.0
    %103 = vmatprep.subr.mxu0 0.0
    %104 = vmatpush1.msra.mxu0 0.0
    %105 = vmatprep.subr.mxu0 0.0
    %106 = vmatpush1.msra.mxu0 0.0
    %107 = vmatprep.subr.mxu0 0.0
    %108 = vmatpush1.msra.mxu0 0.0
    %109 = vmatprep.subr.mxu0 0.0
    %110 = vmatpush1.msra.mxu0 0.0
    %111 = vmatprep.subr.mxu0 0.0
    %112 = vmatpush1.msra.mxu0 0.0
    %113 = vmatprep.subr.mxu0 0.0
    %114 = vmatpush1.msra.mxu0 0.0
    %115 = vmatprep.subr.mxu0 0.0
    %116 = vmatpush1.msra.mxu0 0.0
    %117 = vmatprep.subr.mxu0 0.0
    %118 = vmatpush1.msra.mxu0 0.0
    %119 = vmatprep.subr.mxu0 %v61
    %120 = vmatpush1.msra.mxu0 %v60
    %121 = vmatprep.subr.mxu0 %v59
    %122 = vmatpush1.msra.mxu0 %v58
    %123 = vmatprep.subr.mxu0 %v57
    %124 = vmatpush1.msra.mxu0 %v56
    %125 = vmatprep.subr.mxu0 %v55
    %126 = vmatpush1.msra.mxu0 %v54
    %127 = vmatprep.subr.mxu0 0.0
    %128 = vmatpush2.msra.mxu0 0.0
    %129 = vmatprep.subr.mxu0 0.0
    %130 = vmatpush2.msra.mxu0 0.0
    %131 = vmatprep.subr.mxu0 0.0
    %132 = vmatpush2.msra.mxu0 0.0
    %133 = vmatprep.subr.mxu0 0.0
    %134 = vmatpush2.msra.mxu0 0.0
    %135 = vmatprep.subr.mxu0 0.0
    %136 = vmatpush2.msra.mxu0 0.0
    %137 = vmatprep.subr.mxu0 0.0
    %138 = vmatpush2.msra.mxu0 0.0
    %139 = vmatprep.subr.mxu0 0.0
    %140 = vmatpush2.msra.mxu0 0.0
    %141 = vmatprep.subr.mxu0 0.0
    %142 = vmatpush2.msra.mxu0 0.0
    %143 = vmatprep.subr.mxu0 0.0
    %144 = vmatpush2.msra.mxu0 0.0
    %145 = vmatprep.subr.mxu0 0.0
    %146 = vmatpush2.msra.mxu0 0.0
    %147 = vmatprep.subr.mxu0 0.0
    %148 = vmatpush2.msra.mxu0 0.0
    %149 = vmatprep.subr.mxu0 0.0
    %150 = vmatpush2.msra.mxu0 0.0
    %151 = vmatprep.subr.mxu0 0.0
    %152 = vmatpush2.msra.mxu0 0.0
    %153 = vmatprep.subr.mxu0 0.0
    %154 = vmatpush2.msra.mxu0 0.0
    %155 = vmatprep.subr.mxu0 0.0
    %156 = vmatpush2.msra.mxu0 0.0
    %157 = vmatprep.subr.mxu0 0.0
    %158 = vmatpush2.msra.mxu0 0.0
    %159 = vmatprep.mubr.f32.mxu0 0.0
    %160 = vmatmul.mubr.f32.gmra.mxu0 %v84
    %v161 = vpop.f32.mrf.mxu0
    %v162 = vadd.f32 %v65, %v161
    %v163 = vpop.f32.mrf.mxu0
    %v164 = vadd.f32 %v65, %v163
    %165 = vmatprep.mubr.f32.mxu0 0.0
    %166 = vmatmul.mubr.f32.gmra.mxu0 %v87
    %v167 = vpop.f32.mrf.mxu0
    %v168 = vadd.f32 %v70, %v167
    %v169 = vpop.f32.mrf.mxu0
    %v170 = vadd.f32 %v70, %v169
    %171 = vmatprep.mubr.f32.mxu0 0.0
    %172 = vmatmul.mubr.f32.gmra.mxu0 %v90
    %v173 = vpop.f32.mrf.mxu0
    %v174 = vadd.f32 %v75, %v173
    %v175 = vpop.f32.mrf.mxu0
    %v176 = vadd.f32 %v75, %v175
    %177 = vmatprep.mubr.f32.mxu0 0.0
    %178 = vmatmul.mubr.f32.gmra.mxu0 %v93
    %v179 = vpop.f32.mrf.mxu0
    %v180 = vadd.f32 %v80, %v179
    %v181 = vpop.f32.mrf.mxu0
    %v182 = vadd.f32 %v80, %v181
    %183 = vdwg.mxu0
    %vm184 = vcmp.ge.f32.partialorder %v162, 0.0
    %vm185 = vcmp.ge.f32.partialorder %v164, 0.0
    %vm186 = vcmp.ge.f32.partialorder %v168, 0.0
    %vm187 = vcmp.ge.f32.partialorder %v170, 0.0
    %vm188 = vcmp.ge.f32.partialorder %v174, 0.0
    %vm189 = vcmp.ge.f32.partialorder %v176, 0.0
    %vm190 = vcmp.ge.f32.partialorder %v180, 0.0
    %vm191 = vcmp.ge.f32.partialorder %v182, 0.0
    %v192 = vmul.f32 %v162, 0.01
    %v193 = vmul.f32 %v164, 0.01
    %v194 = vmul.f32 %v168, 0.01
    %v195 = vmul.f32 %v170, 0.01
    %v196 = vmul.f32 %v174, 0.01
    %v197 = vmul.f32 %v176, 0.01
    %v198 = vmul.f32 %v180, 0.01
    %v199 = vmul.f32 %v182, 0.01
    %v200 = vsel %vm184, %v162, %v192
    %v201 = vsel %vm185, %v164, %v193
    %v202 = vsel %vm186, %v168, %v194
    %v203 = vsel %vm187, %v170, %v195
    %v204 = vsel %vm188, %v174, %v196
    %v205 = vsel %vm189, %v176, %v197
    %v206 = vsel %vm190, %v180, %v198
    %v207 = vsel %vm191, %v182, %v199
    %v208 = vadd.f32 %v54, %v200
    %v209 = vadd.f32 %v55, %v201
    %v210 = vadd.f32 %v56, %v202
    %v211 = vadd.f32 %v57, %v203
    %v212 = vadd.f32 %v58, %v204
    %v213 = vadd.f32 %v59, %v205
    %v214 = vadd.f32 %v60, %v206
    %v215 = vadd.f32 %v61, %v207
    %216 = vset.pattern.permute.xlu0 1
    %217 = vperm.xlu0 %216, %v26
    %v218 = vpop.permute.xlu0 %217
    %220 = vset.pattern.permute.xlu0 1
    %221 = vperm.xlu0 %220, %v27
    %v222 = vpop.permute.xlu0 %221
    %224 = vset.pattern.permute.xlu0 1
    %225 = vperm.xlu0 %224, %v28
    %v226 = vpop.permute.xlu0 %225
    %228 = vset.pattern.permute.xlu0 1
    %229 = vperm.xlu0 %228, %v29
    %v230 = vpop.permute.xlu0 %229
    %v233 = vsel %vm82, %v19, 0
    %v236 = vsel %vm82, %v20, 0
    %v239 = vsel %vm82, %v21, 0
    %v242 = vsel %vm82, %v22, 0
    %244 = vmatprep.subr.mxu0 0.0
    %245 = vmatpush1.msra.mxu0 0.0
    %246 = vmatprep.subr.mxu0 0.0
    %247 = vmatpush1.msra.mxu0 0.0
    %248 = vmatprep.subr.mxu0 0.0
    %249 = vmatpush1.msra.mxu0 0.0
    %250 = vmatprep.subr.mxu0 0.0
    %251 = vmatpush1.msra.mxu0 0.0
    %252 = vmatprep.subr.mxu0 0.0
    %253 = vmatpush1.msra.mxu0 0.0
    %254 = vmatprep.subr.mxu0 0.0
    %255 = vmatpush1.msra.mxu0 0.0
    %256 = vmatprep.subr.mxu0 0.0
    %257 = vmatpush1.msra.mxu0 0.0
    %258 = vmatprep.subr.mxu0 0.0
    %259 = vmatpush1.msra.mxu0 0.0
    %260 = vmatprep.subr.mxu0 0.0
    %261 = vmatpush1.msra.mxu0 0.0
    %262 = vmatprep.subr.mxu0 0.0
    %263 = vmatpush1.msra.mxu0 0.0
    %264 = vmatprep.subr.mxu0 0.0
    %265 = vmatpush1.msra.mxu0 0.0
    %266 = vmatprep.subr.mxu0 0.0
    %267 = vmatpush1.msra.mxu0 0.0
    %268 = vmatprep.subr.mxu0 %v215
    %269 = vmatpush1.msra.mxu0 %v214
    %270 = vmatprep.subr.mxu0 %v213
    %271 = vmatpush1.msra.mxu0 %v212
    %272 = vmatprep.subr.mxu0 %v211
    %273 = vmatpush1.msra.mxu0 %v210
    %274 = vmatprep.subr.mxu0 %v209
    %275 = vmatpush1.msra.mxu0 %v208
    %276 = vmatprep.subr.mxu0 0.0
    %277 = vmatpush2.msra.mxu0 0.0
    %278 = vmatprep.subr.mxu0 0.0
    %279 = vmatpush2.msra.mxu0 0.0
    %280 = vmatprep.subr.mxu0 0.0
    %281 = vmatpush2.msra.mxu0 0.0
    %282 = vmatprep.subr.mxu0 0.0
    %283 = vmatpush2.msra.mxu0 0.0
    %284 = vmatprep.subr.mxu0 0.0
    %285 = vmatpush2.msra.mxu0 0.0
    %286 = vmatprep.subr.mxu0 0.0
    %287 = vmatpush2.msra.mxu0 0.0
    %288 = vmatprep.subr.mxu0 0.0
    %289 = vmatpush2.msra.mxu0 0.0
    %290 = vmatprep.subr.mxu0 0.0
    %291 = vmatpush2.msra.mxu0 0.0
    %292 = vmatprep.subr.mxu0 0.0
    %293 = vmatpush2.msra.mxu0 0.0
    %294 = vmatprep.subr.mxu0 0.0
    %295 = vmatpush2.msra.mxu0 0.0
    %296 = vmatprep.subr.mxu0 0.0
    %297 = vmatpush2.msra.mxu0 0.0
    %298 = vmatprep.subr.mxu0 0.0
    %299 = vmatpush2.msra.mxu0 0.0
    %300 = vmatprep.subr.mxu0 0.0
    %301 = vmatpush2.msra.mxu0 0.0
    %302 = vmatprep.subr.mxu0 0.0
    %303 = vmatpush2.msra.mxu0 0.0
    %304 = vmatprep.subr.mxu0 0.0
    %305 = vmatpush2.msra.mxu0 0.0
    %306 = vmatprep.subr.mxu0 0.0
    %307 = vmatpush2.msra.mxu0 0.0
    %308 = vmatprep.mubr.f32.mxu0 0.0
    %309 = vmatmul.mubr.f32.gmra.mxu0 %v233
    %v310 = vpop.f32.mrf.mxu0
    %v311 = vadd.f32 %v218, %v310
    %v312 = vpop.f32.mrf.mxu0
    %v313 = vadd.f32 %v218, %v312
    %314 = vmatprep.mubr.f32.mxu0 0.0
    %315 = vmatmul.mubr.f32.gmra.mxu0 %v236
    %v316 = vpop.f32.mrf.mxu0
    %v317 = vadd.f32 %v222, %v316
    %v318 = vpop.f32.mrf.mxu0
    %v319 = vadd.f32 %v222, %v318
    %320 = vmatprep.mubr.f32.mxu0 0.0
    %321 = vmatmul.mubr.f32.gmra.mxu0 %v239
    %v322 = vpop.f32.mrf.mxu0
    %v323 = vadd.f32 %v226, %v322
    %v324 = vpop.f32.mrf.mxu0
    %v325 = vadd.f32 %v226, %v324
    %326 = vmatprep.mubr.f32.mxu0 0.0
    %327 = vmatmul.mubr.f32.gmra.mxu0 %v242
    %v328 = vpop.f32.mrf.mxu0
    %v329 = vadd.f32 %v230, %v328
    %v330 = vpop.f32.mrf.mxu0
    %v331 = vadd.f32 %v230, %v330
    %332 = vdwg.mxu0
    %vm333 = vcmp.ge.f32.partialorder %v311, 0.0
    %vm334 = vcmp.ge.f32.partialorder %v313, 0.0
    %vm335 = vcmp.ge.f32.partialorder %v317, 0.0
    %vm336 = vcmp.ge.f32.partialorder %v319, 0.0
    %vm337 = vcmp.ge.f32.partialorder %v323, 0.0
    %vm338 = vcmp.ge.f32.partialorder %v325, 0.0
    %vm339 = vcmp.ge.f32.partialorder %v329, 0.0
    %vm340 = vcmp.ge.f32.partialorder %v331, 0.0
    %v341 = vmul.f32 %v311, 0.01
    %v342 = vmul.f32 %v313, 0.01
    %v343 = vmul.f32 %v317, 0.01
    %v344 = vmul.f32 %v319, 0.01
    %v345 = vmul.f32 %v323, 0.01
    %v346 = vmul.f32 %v325, 0.01
    %v347 = vmul.f32 %v329, 0.01
    %v348 = vmul.f32 %v331, 0.01
    %v349 = vsel %vm333, %v311, %v341
    %v350 = vsel %vm334, %v313, %v342
    %v351 = vsel %vm335, %v317, %v343
    %v352 = vsel %vm336, %v319, %v344
    %v353 = vsel %vm337, %v323, %v345
    %v354 = vsel %vm338, %v325, %v346
    %v355 = vsel %vm339, %v329, %v347
    %v356 = vsel %vm340, %v331, %v348
    %v357 = vadd.f32 %v208, %v349
    %v358 = vadd.f32 %v209, %v350
    %v359 = vadd.f32 %v210, %v351
    %v360 = vadd.f32 %v211, %v352
    %v361 = vadd.f32 %v212, %v353
    %v362 = vadd.f32 %v213, %v354
    %v363 = vadd.f32 %v214, %v355
    %v364 = vadd.f32 %v215, %v356
    %365 = vset.pattern.permute.xlu0 2
    %366 = vperm.xlu0 %365, %v26
    %v367 = vpop.permute.xlu0 %366
    %369 = vset.pattern.permute.xlu0 2
    %370 = vperm.xlu0 %369, %v27
    %v371 = vpop.permute.xlu0 %370
    %v374 = vsel %vm82, %v23, 0
    %v377 = vsel %vm82, %v24, 0
    %379 = vmatprep.subr.mxu0 0.0
    %380 = vmatpush1.msra.mxu0 0.0
    %381 = vmatprep.subr.mxu0 0.0
    %382 = vmatpush1.msra.mxu0 0.0
    %383 = vmatprep.subr.mxu0 0.0
    %384 = vmatpush1.msra.mxu0 0.0
    %385 = vmatprep.subr.mxu0 0.0
    %386 = vmatpush1.msra.mxu0 0.0
    %387 = vmatprep.subr.mxu0 0.0
    %388 = vmatpush1.msra.mxu0 0.0
    %389 = vmatprep.subr.mxu0 0.0
    %390 = vmatpush1.msra.mxu0 0.0
    %391 = vmatprep.subr.mxu0 0.0
    %392 = vmatpush1.msra.mxu0 0.0
    %393 = vmatprep.subr.mxu0 0.0
    %394 = vmatpush1.msra.mxu0 0.0
    %395 = vmatprep.subr.mxu0 0.0
    %396 = vmatpush1.msra.mxu0 0.0
    %397 = vmatprep.subr.mxu0 0.0
    %398 = vmatpush1.msra.mxu0 0.0
    %399 = vmatprep.subr.mxu0 0.0
    %400 = vmatpush1.msra.mxu0 0.0
    %401 = vmatprep.subr.mxu0 0.0
    %402 = vmatpush1.msra.mxu0 0.0
    %403 = vmatprep.subr.mxu0 %v364
    %404 = vmatpush1.msra.mxu0 %v363
    %405 = vmatprep.subr.mxu0 %v362
    %406 = vmatpush1.msra.mxu0 %v361
    %407 = vmatprep.subr.mxu0 %v360
    %408 = vmatpush1.msra.mxu0 %v359
    %409 = vmatprep.subr.mxu0 %v358
    %410 = vmatpush1.msra.mxu0 %v357
    %411 = vmatprep.subr.mxu0 0.0
    %412 = vmatpush2.msra.mxu0 0.0
    %413 = vmatprep.subr.mxu0 0.0
    %414 = vmatpush2.msra.mxu0 0.0
    %415 = vmatprep.subr.mxu0 0.0
    %416 = vmatpush2.msra.mxu0 0.0
    %417 = vmatprep.subr.mxu0 0.0
    %418 = vmatpush2.msra.mxu0 0.0
    %419 = vmatprep.subr.mxu0 0.0
    %420 = vmatpush2.msra.mxu0 0.0
    %421 = vmatprep.subr.mxu0 0.0
    %422 = vmatpush2.msra.mxu0 0.0
    %423 = vmatprep.subr.mxu0 0.0
    %424 = vmatpush2.msra.mxu0 0.0
    %425 = vmatprep.subr.mxu0 0.0
    %426 = vmatpush2.msra.mxu0 0.0
    %427 = vmatprep.subr.mxu0 0.0
    %428 = vmatpush2.msra.mxu0 0.0
    %429 = vmatprep.subr.mxu0 0.0
    %430 = vmatpush2.msra.mxu0 0.0
    %431 = vmatprep.subr.mxu0 0.0
    %432 = vmatpush2.msra.mxu0 0.0
    %433 = vmatprep.subr.mxu0 0.0
    %434 = vmatpush2.msra.mxu0 0.0
    %435 = vmatprep.subr.mxu0 0.0
    %436 = vmatpush2.msra.mxu0 0.0
    %437 = vmatprep.subr.mxu0 0.0
    %438 = vmatpush2.msra.mxu0 0.0
    %439 = vmatprep.subr.mxu0 0.0
    %440 = vmatpush2.msra.mxu0 0.0
    %441 = vmatprep.subr.mxu0 0.0
    %442 = vmatpush2.msra.mxu0 0.0
    %443 = vmatprep.mubr.f32.mxu0 0.0
    %444 = vmatmul.mubr.f32.gmra.mxu0 %v374
    %v445 = vpop.f32.mrf.mxu0
    %v446 = vadd.f32 %v367, %v445
    %v447 = vpop.f32.mrf.mxu0
    %v448 = vadd.f32 %v367, %v447
    %449 = vmatprep.mubr.f32.mxu0 0.0
    %450 = vmatmul.mubr.f32.gmra.mxu0 %v377
    %v451 = vpop.f32.mrf.mxu0
    %v452 = vadd.f32 %v371, %v451
    %v453 = vpop.f32.mrf.mxu0
    %v454 = vadd.f32 %v371, %v453
    %455 = vdwg.mxu0
    %vm456 = vcmp.ge.f32.partialorder %v446, 0.0
    %vm457 = vcmp.ge.f32.partialorder %v448, 0.0
    %vm458 = vcmp.ge.f32.partialorder %v452, 0.0
    %vm459 = vcmp.ge.f32.partialorder %v454, 0.0
    %v460 = vmul.f32 %v446, 0.01
    %v461 = vmul.f32 %v448, 0.01
    %v462 = vmul.f32 %v452, 0.01
    %v463 = vmul.f32 %v454, 0.01
    %v464 = vsel %vm456, %v446, %v460
    %v465 = vsel %vm457, %v448, %v461
    %v466 = vsel %vm458, %v452, %v462
    %v467 = vsel %vm459, %v454, %v463
    %468 = vset.pattern.permute.xlu0 3
    %469 = vperm.xlu0 %468, %v26
    %v470 = vpop.permute.xlu0 %469
    %vm472 = vcmask 130048
    %v474 = vsel %vm472, %v25, 0
    %476 = vmatprep.subr.mxu0 0.0
    %477 = vmatpush1.msra.mxu0 0.0
    %478 = vmatprep.subr.mxu0 0.0
    %479 = vmatpush1.msra.mxu0 0.0
    %480 = vmatprep.subr.mxu0 0.0
    %481 = vmatpush1.msra.mxu0 0.0
    %482 = vmatprep.subr.mxu0 0.0
    %483 = vmatpush1.msra.mxu0 0.0
    %484 = vmatprep.subr.mxu0 0.0
    %485 = vmatpush1.msra.mxu0 0.0
    %486 = vmatprep.subr.mxu0 0.0
    %487 = vmatpush1.msra.mxu0 0.0
    %488 = vmatprep.subr.mxu0 0.0
    %489 = vmatpush1.msra.mxu0 0.0
    %490 = vmatprep.subr.mxu0 0.0
    %491 = vmatpush1.msra.mxu0 0.0
    %492 = vmatprep.subr.mxu0 0.0
    %493 = vmatpush1.msra.mxu0 0.0
    %494 = vmatprep.subr.mxu0 0.0
    %495 = vmatpush1.msra.mxu0 0.0
    %496 = vmatprep.subr.mxu0 0.0
    %497 = vmatpush1.msra.mxu0 0.0
    %498 = vmatprep.subr.mxu0 0.0
    %499 = vmatpush1.msra.mxu0 0.0
    %500 = vmatprep.subr.mxu0 0.0
    %501 = vmatpush1.msra.mxu0 0.0
    %502 = vmatprep.subr.mxu0 0.0
    %503 = vmatpush1.msra.mxu0 0.0
    %504 = vmatprep.subr.mxu0 %v467
    %505 = vmatpush1.msra.mxu0 %v466
    %506 = vmatprep.subr.mxu0 %v465
    %507 = vmatpush1.msra.mxu0 %v464
    %508 = vmatprep.subr.mxu0 0.0
    %509 = vmatpush2.msra.mxu0 0.0
    %510 = vmatprep.subr.mxu0 0.0
    %511 = vmatpush2.msra.mxu0 0.0
    %512 = vmatprep.subr.mxu0 0.0
    %513 = vmatpush2.msra.mxu0 0.0
    %514 = vmatprep.subr.mxu0 0.0
    %515 = vmatpush2.msra.mxu0 0.0
    %516 = vmatprep.subr.mxu0 0.0
    %517 = vmatpush2.msra.mxu0 0.0
    %518 = vmatprep.subr.mxu0 0.0
    %519 = vmatpush2.msra.mxu0 0.0
    %520 = vmatprep.subr.mxu0 0.0
    %521 = vmatpush2.msra.mxu0 0.0
    %522 = vmatprep.subr.mxu0 0.0
    %523 = vmatpush2.msra.mxu0 0.0
    %524 = vmatprep.subr.mxu0 0.0
    %525 = vmatpush2.msra.mxu0 0.0
    %526 = vmatprep.subr.mxu0 0.0
    %527 = vmatpush2.msra.mxu0 0.0
    %528 = vmatprep.subr.mxu0 0.0
    %529 = vmatpush2.msra.mxu0 0.0
    %530 = vmatprep.subr.mxu0 0.0
    %531 = vmatpush2.msra.mxu0 0.0
    %532 = vmatprep.subr.mxu0 0.0
    %533 = vmatpush2.msra.mxu0 0.0
    %534 = vmatprep.subr.mxu0 0.0
    %535 = vmatpush2.msra.mxu0 0.0
    %536 = vmatprep.subr.mxu0 0.0
    %537 = vmatpush2.msra.mxu0 0.0
    %538 = vmatprep.subr.mxu0 0.0
    %539 = vmatpush2.msra.mxu0 0.0
    %540 = vmatprep.mubr.f32.mxu0 0.0
    %541 = vmatmul.mubr.f32.gmra.mxu0 %v474
    %v542 = vpop.f32.mrf.mxu0
    %v543 = vadd.f32 %v470, %v542
    %v544 = vpop.f32.mrf.mxu0
    %v545 = vadd.f32 %v470, %v544
    %546 = vdwg.mxu0
    %vm547 = vcmp.ge.f32.partialorder %v543, 0.0
    %vm548 = vcmp.ge.f32.partialorder %v545, 0.0
    %v549 = vmul.f32 %v543, 0.01
    %v550 = vmul.f32 %v545, 0.01
    %v551 = vsel %vm547, %v543, %v549
    %v552 = vsel %vm548, %v545, %v550
    %553 = vset.pattern.permute.xlu0 5
    %554 = vperm.xlu0 %553, %v26
    %v555 = vpop.permute.xlu0 %554
    %v557 = vmul.f32 %v555, %v551
    %v558 = vmul.f32 %v555, %v552
    %v559 = vrot.slane %v557, 4
    %v560 = vadd.f32 %v557, %v559
    %v561 = vrot.slane %v560, 2
    %v562 = vadd.f32 %v560, %v561
    %v563 = vrot.slane %v562, 1
    %v564 = vadd.f32 %v562, %v563
    %v565 = vrot.slane %v558, 4
    %v566 = vadd.f32 %v558, %v565
    %v567 = vrot.slane %v566, 2
    %v568 = vadd.f32 %v566, %v567
    %v569 = vrot.slane %v568, 1
    %v570 = vadd.f32 %v568, %v569
    %571 = vset.pattern.permute.xlu0 4
    %572 = vperm.xlu0 %571, %v26
    %v573 = vpop.permute.xlu0 %572
    %v575 = vadd.f32 %v564, %v573
    %v576 = vadd.f32 %v570, %v573
    %v577 = vsub.f32 0.0, %v575
    %v578 = vsub.f32 0.0, %v576
    %v579 = vmul.f32 %v577, 1.442695
    %v580 = vpow.pop %v579
    %v581 = vmul.f32 %v578, 1.442695
    %v582 = vpow.pop %v581
    %v583 = vadd.f32 %v580, 1.0
    %v584 = vadd.f32 %v582, 1.0
    %v585 = vrcp.pop %v583
    %v586 = vmul.f32 1.0, %v585
    %v587 = vrcp.pop %v584
    %v588 = vmul.f32 1.0, %v587
    %v591 = vcombine.low %v586, %v588
    %v593 = vunpack.c.l.s4 1966171168
    %v594 = vunpack.c.0.s8 %v593
    %v595 = vlaneseq
    %v596 = vshrl.u32 %v595, 7
    %v597 = vsub.s32 %v594, %v596
    %v598 = vrot.slane %v591, %v597
    %v600 = vunpack.c.l.s4 1966171168
    %v601 = vunpack.c.0.s8 %v600
    %v602 = vlaneseq
    %v603 = vshrl.u32 %v602, 7
    %v604 = vsub.s32 %v601, %v603
    %v605 = vrot.slane %v598, %v604
    %v607 = vlaneseq
    %vm608 = vcmp.ge.s32.totalorder %v607, 0
    %vm609 = vcmp.lt.s32.totalorder %v607, 256
    %vm610 = vmand %vm608, %vm609
    %611 = vst.msk [vmem:[#allocation3] sm:$0x3] %vm610, %v605
    // Predicated region
    $region14: #{tpu_custom_call.1} parent=1 // pred_check
      _
    $region15: #{tpu_custom_call.1} parent=1 // pred_check_branch
      %613 = sbr.rel (0) target = $region17
    $region16: #{tpu_custom_call.1} parent=1 // pred_region
      %s615 = ssub.s32 32, 32
      %616 = vsyncadd [#allocation4], %s615
      %s618 = sshll.u32 [#allocation3], 4
      %s619 = int_to_ptr.vmem [resolvable:$true] %s618
      %621 = dma.vmem_to_hbm [thread:$0]  %s619, 32, %s3, [#allocation4]
    $region17: #{tpu_custom_call.1} parent=1 // pred_fallthru
      _
    // Predicated region
    $region18: #{tpu_custom_call.1} parent=1 // pred_check
      _
    $region19: #{tpu_custom_call.1} parent=1 // pred_check_branch
      %623 = sbr.rel (0) target = $region21
    $region20: #{tpu_custom_call.1} parent=1 // pred_region
      %624 = dma.done [#allocation4], 32
    $region21: #{tpu_custom_call.1} parent=1 // pred_fallthru
      _
    %625 = vsyncpa [#allocation4], 1

</llo_original>
